<compile_context>
chip_gen: v5e
topology: v5e:2x2
jax: 0.10.0
libtpu: 0.0.40
codegen_flags: <defaults>
</compile_context>

<pallas_src>
import math
import jax
import jax.numpy as jnp
from jax.experimental import pallas as pl
from jax.experimental.pallas import tpu as pltpu


def _kernel(x_ref, t_ref, *rest):
    """rest = (param refs..., out_ref).

    Param ref ordering (prepared by init_params / the wrapper):
      [w_lin_i (in, out), vec3_i (3, out)] * num_hidden_layers
        where vec3 rows are [b_lin, w_tr, b_tr]
      + [w_out (in, out), b_out (1, out)]
    """
    out_ref = rest[-1]
    p = rest[:-1]
    n_pairs = (len(p) - 2) // 2

    x = x_ref[...]
    if x.dtype != jnp.float32:
        x = x.astype(jnp.float32)
    t = t_ref[...]                              # (TILE_B, 1)
    if t.dtype != jnp.float32:
        t = t.astype(jnp.float32)

    idx = 0
    for _ in range(n_pairs):
        w = p[idx][...]                         # (in, out)
        vec3 = p[idx + 1][...]                  # (3, out): b_lin / w_tr / b_tr
        b = vec3[0:1, :]
        w_t = vec3[1:2, :]
        b_t = vec3[2:3, :]

        # linear: X @ W^T + b  (W pre-transposed to (in, out))
        x = jnp.dot(x, w, preferred_element_type=jnp.float32) + b   # (TILE_B, out)
        # thresholds = times @ w_tr.T + b_tr  (K=1 matmul -> broadcast FMA on VPU)
        thr = t * w_t + b_t                                          # (TILE_B, out)
        # torch.where(X > thr, X, thr) == elementwise max
        x = jnp.maximum(x, thr)
        idx += 2

    w = p[idx][...]                             # (in, out_shape)
    b = p[idx + 1][...]                         # (1, out_shape)
    x = jnp.dot(x, w, preferred_element_type=jnp.float32) + b

    # softmax over dim=1 (feature axis); max-stabilized, single reciprocal
    m = jnp.max(x, axis=1, keepdims=True)
    e = jnp.exp(x - m)
    inv = pl.reciprocal(jnp.sum(e, axis=1, keepdims=True), approx=False)
    out_ref[...] = (e * inv).astype(out_ref.dtype)


def classifier_meta_house_forward(x, times, params, out_shape, tile_b=512):
    """x: (B, D), times: (B, 1) or (B, 1, 1), params: flat list in kernel order.

    Tiles the batch dimension with TILE_B rows per grid step; parameters stay
    VMEM-resident across steps. Pads B up to a multiple of TILE_B if needed and
    slices the result back.
    """
    # Match the PyTorch module: squeeze a trailing singleton on 3-D times.
    if times.ndim == 3:
        times = jnp.squeeze(times, axis=-1)

    x = x.astype(jnp.float32)
    times = times.astype(jnp.float32)

    B, D = x.shape

    if B <= tile_b:
        tile_b = B            # single full-extent block (always layout-legal)
        b_pad = B
    else:
        # keep sublane tiles aligned; pad batch up to a multiple of tile_b
        tile_b = max(8, (tile_b // 8) * 8)
        b_pad = ((B + tile_b - 1) // tile_b) * tile_b
        if b_pad != B:
            x = jnp.pad(x, ((0, b_pad - B), (0, 0)))
            times = jnp.pad(times, ((0, b_pad - B), (0, 0)))

    grid = (b_pad // tile_b,)

    x_spec = pl.BlockSpec((tile_b, D), lambda i: (i, 0))
    t_spec = pl.BlockSpec((tile_b, 1), lambda i: (i, 0))
    # weights / packed bias-threshold vectors: full array, resident across grid
    param_specs = [pl.BlockSpec(p.shape, lambda i: (0, 0)) for p in params]
    out_spec = pl.BlockSpec((tile_b, out_shape), lambda i: (i, 0))

    # --- cost estimate (advisory) ---
    n_pairs = (len(params) - 2) // 2
    flops = 0
    for li in range(n_pairs):
        w = params[2 * li]
        flops += 2 * b_pad * w.shape[0] * w.shape[1] + 3 * b_pad * w.shape[1]
    w_out = params[-2]
    flops += 2 * b_pad * w_out.shape[0] * w_out.shape[1] + 3 * b_pad * out_shape
    transcendentals = b_pad * out_shape
    bytes_accessed = (
        int(x.size) * x.dtype.itemsize
        + int(times.size) * times.dtype.itemsize
        + b_pad * out_shape * 4
        + sum(int(p.size) * p.dtype.itemsize for p in params)
    )
    cost = pl.CostEstimate(flops=flops, transcendentals=transcendentals,
                           bytes_accessed=bytes_accessed)

    out = pl.pallas_call(
        _kernel,
        out_shape=jax.ShapeDtypeStruct((b_pad, out_shape), jnp.float32),
        grid=grid,
        in_specs=[x_spec, t_spec] + param_specs,
        out_specs=out_spec,
        compiler_params=pltpu.CompilerParams(
            dimension_semantics=("parallel",),
        ),
        cost_estimate=cost,
    )(x, times, *params)

    if b_pad != B:
        out = out[:B]
    return out


def init_params(key, data_shape, hidden_shapes, out_shape):
    """Deterministic init mirroring the PyTorch module (kaiming_normal_ weights,
    zero biases). Returns params in kernel order:
      per hidden layer: w_lin transposed to (in, out), vec3 = stack([b_lin, w_tr, b_tr]) (3, out)
      then: w_out (in, out), b_out (1, out)
    """
    params = []

    def kaiming(k, out_dim, in_dim):
        std = math.sqrt(2.0 / in_dim)          # fan_in, gain=sqrt(2)
        return jax.random.normal(k, (out_dim, in_dim), dtype=jnp.float32) * std

    dims = [data_shape] + list(hidden_shapes)
    keys = jax.random.split(key, 2 * len(hidden_shapes) + 1)
    k_idx = 0
    for i in range(len(hidden_shapes)):
        in_d, out_d = dims[i], dims[i + 1]
        w_lin = kaiming(keys[k_idx], out_d, in_d); k_idx += 1
        b_lin = jnp.zeros((out_d,), jnp.float32)
        w_tr = kaiming(keys[k_idx], out_d, 1); k_idx += 1
        b_tr = jnp.zeros((out_d,), jnp.float32)
        vec3 = jnp.stack([b_lin, w_tr.reshape(out_d), b_tr], axis=0)   # (3, out)
        params += [w_lin.T, vec3]
    w_out = kaiming(keys[k_idx], out_shape, hidden_shapes[-1])
    b_out = jnp.zeros((out_shape,), jnp.float32)
    params += [w_out.T, b_out.reshape(1, out_shape)]
    return params


def reference_forward(x, times, params):
    """Pure-JAX reference (same math, unpacks the (3, out) vectors)."""
    n_pairs = (len(params) - 2) // 2
    h = x
    idx = 0
    for _ in range(n_pairs):
        w, vec3 = params[idx], params[idx + 1]
        b, w_t, b_t = vec3[0:1, :], vec3[1:2, :], vec3[2:3, :]
        h = h @ w + b
        thr = times * w_t + b_t
        h = jnp.where(h > thr, h, thr)
        idx += 2
    h = h @ params[idx] + params[idx + 1]
    return jax.nn.softmax(h, axis=1)


if __name__ == "__main__":
    # Small shapes consistent with the module's forward:
    #   X: (batch, data_shape), times: (batch, 1)
    batch = 64
    data_shape = 16
    hidden_shapes = [32, 32]
    out_shape = 8
    tile_b = 32            # small tile to exercise the batch grid (2 steps)

    key = jax.random.PRNGKey(0)
    kx, kt, kp = jax.random.split(key, 3)

    x = jax.random.normal(kx, (batch, data_shape), dtype=jnp.float32)
    times = jax.random.uniform(kt, (batch, 1), dtype=jnp.float32)
    params = init_params(kp, data_shape, hidden_shapes, out_shape)

    out = classifier_meta_house_forward(x, times, params, out_shape, tile_b=tile_b)
    out = jax.block_until_ready(out)

    ref = reference_forward(x, times, params)
    assert out.shape == (batch, out_shape)
    assert jnp.allclose(out, ref, atol=1e-5, rtol=1e-5), "mismatch vs JAX reference"

    print("KERNEL_OK")
</pallas_src>

<mosaic_0001>
module attributes {stable_mosaic.version = 11 : i64} {
  func.func @_kernel(%arg0: i32, %arg1: memref<32x16xf32, #tpu.memory_space<vmem>>, %arg2: memref<32x1xf32, #tpu.memory_space<vmem>>, %arg3: memref<16x32xf32, #tpu.memory_space<vmem>>, %arg4: memref<3x32xf32, #tpu.memory_space<vmem>>, %arg5: memref<32x32xf32, #tpu.memory_space<vmem>>, %arg6: memref<3x32xf32, #tpu.memory_space<vmem>>, %arg7: memref<32x8xf32, #tpu.memory_space<vmem>>, %arg8: memref<1x8xf32, #tpu.memory_space<vmem>>, %arg9: memref<32x8xf32, #tpu.memory_space<vmem>>) attributes {dimension_semantics = [#tpu.dimension_semantics<parallel>], iteration_bounds = array<i64: 2>, scalar_prefetch = 0 : i64, scratch_operands = 0 : i64, tpu.core_type = #tpu.core_type<tc>, window_params = [{transform_indices = @transform_0, window_bounds = array<i64: 32, 16>}, {transform_indices = @transform_1, window_bounds = array<i64: 32, 1>}, {pipeline_mode = #tpu.pipeline_mode<synchronous>, transform_indices = @transform_2, window_bounds = array<i64: 16, 32>}, {pipeline_mode = #tpu.pipeline_mode<synchronous>, transform_indices = @transform_3, window_bounds = array<i64: 3, 32>}, {pipeline_mode = #tpu.pipeline_mode<synchronous>, transform_indices = @transform_4, window_bounds = array<i64: 32, 32>}, {pipeline_mode = #tpu.pipeline_mode<synchronous>, transform_indices = @transform_5, window_bounds = array<i64: 3, 32>}, {pipeline_mode = #tpu.pipeline_mode<synchronous>, transform_indices = @transform_6, window_bounds = array<i64: 32, 8>}, {pipeline_mode = #tpu.pipeline_mode<synchronous>, transform_indices = @transform_7, window_bounds = array<i64: 1, 8>}, {transform_indices = @transform_8, window_bounds = array<i64: 32, 8>}]} {
    %c0 = arith.constant 0 : index
    %c0_0 = arith.constant 0 : index
    %0 = vector.load %arg1[%c0, %c0_0] : memref<32x16xf32, #tpu.memory_space<vmem>>, vector<32x16xf32>
    %c0_1 = arith.constant 0 : index
    %c0_2 = arith.constant 0 : index
    %1 = vector.load %arg2[%c0_1, %c0_2] : memref<32x1xf32, #tpu.memory_space<vmem>>, vector<32x1xf32>
    %c0_3 = arith.constant 0 : index
    %c0_4 = arith.constant 0 : index
    %2 = vector.load %arg3[%c0_3, %c0_4] : memref<16x32xf32, #tpu.memory_space<vmem>>, vector<16x32xf32>
    %c0_5 = arith.constant 0 : index
    %c0_6 = arith.constant 0 : index
    %3 = vector.load %arg4[%c0_5, %c0_6] : memref<3x32xf32, #tpu.memory_space<vmem>>, vector<3x32xf32>
    %4 = vector.extract_strided_slice %3 {offsets = [0, 0], sizes = [1, 32], strides = [1, 1]} : vector<3x32xf32> to vector<1x32xf32>
    %5 = vector.extract_strided_slice %3 {offsets = [1, 0], sizes = [1, 32], strides = [1, 1]} : vector<3x32xf32> to vector<1x32xf32>
    %6 = vector.extract_strided_slice %3 {offsets = [2, 0], sizes = [1, 32], strides = [1, 1]} : vector<3x32xf32> to vector<1x32xf32>
    %cst = arith.constant dense<0.000000e+00> : vector<32x32xf32>
    %7 = tpu.matmul %0, %2, %cst {dimension_numbers = #tpu.dot_dimension_numbers<[1], [0], [0], [1], [0, 0, 1, 1], [], []>} : vector<32x16xf32>, vector<16x32xf32>, vector<32x32xf32> -> vector<32x32xf32>
    %8 = vector.broadcast %4 : vector<1x32xf32> to vector<32x32xf32>
    %9 = arith.addf %7, %8 : vector<32x32xf32>
    %10 = vector.broadcast %1 : vector<32x1xf32> to vector<32x32xf32>
    %11 = vector.broadcast %5 : vector<1x32xf32> to vector<32x32xf32>
    %12 = arith.mulf %10, %11 : vector<32x32xf32>
    %13 = vector.broadcast %6 : vector<1x32xf32> to vector<32x32xf32>
    %14 = arith.addf %12, %13 : vector<32x32xf32>
    %15 = arith.maximumf %9, %14 : vector<32x32xf32>
    %c0_7 = arith.constant 0 : index
    %c0_8 = arith.constant 0 : index
    %16 = vector.load %arg5[%c0_7, %c0_8] : memref<32x32xf32, #tpu.memory_space<vmem>>, vector<32x32xf32>
    %c0_9 = arith.constant 0 : index
    %c0_10 = arith.constant 0 : index
    %17 = vector.load %arg6[%c0_9, %c0_10] : memref<3x32xf32, #tpu.memory_space<vmem>>, vector<3x32xf32>
    %18 = vector.extract_strided_slice %17 {offsets = [0, 0], sizes = [1, 32], strides = [1, 1]} : vector<3x32xf32> to vector<1x32xf32>
    %19 = vector.extract_strided_slice %17 {offsets = [1, 0], sizes = [1, 32], strides = [1, 1]} : vector<3x32xf32> to vector<1x32xf32>
    %20 = vector.extract_strided_slice %17 {offsets = [2, 0], sizes = [1, 32], strides = [1, 1]} : vector<3x32xf32> to vector<1x32xf32>
    %cst_11 = arith.constant dense<0.000000e+00> : vector<32x32xf32>
    %21 = tpu.matmul %15, %16, %cst_11 {dimension_numbers = #tpu.dot_dimension_numbers<[1], [0], [0], [1], [0, 0, 1, 1], [], []>} : vector<32x32xf32>, vector<32x32xf32>, vector<32x32xf32> -> vector<32x32xf32>
    %22 = vector.broadcast %18 : vector<1x32xf32> to vector<32x32xf32>
    %23 = arith.addf %21, %22 : vector<32x32xf32>
    %24 = vector.broadcast %1 : vector<32x1xf32> to vector<32x32xf32>
    %25 = vector.broadcast %19 : vector<1x32xf32> to vector<32x32xf32>
    %26 = arith.mulf %24, %25 : vector<32x32xf32>
    %27 = vector.broadcast %20 : vector<1x32xf32> to vector<32x32xf32>
    %28 = arith.addf %26, %27 : vector<32x32xf32>
    %29 = arith.maximumf %23, %28 : vector<32x32xf32>
    %c0_12 = arith.constant 0 : index
    %c0_13 = arith.constant 0 : index
    %30 = vector.load %arg7[%c0_12, %c0_13] : memref<32x8xf32, #tpu.memory_space<vmem>>, vector<32x8xf32>
    %c0_14 = arith.constant 0 : index
    %c0_15 = arith.constant 0 : index
    %31 = vector.load %arg8[%c0_14, %c0_15] : memref<1x8xf32, #tpu.memory_space<vmem>>, vector<1x8xf32>
    %cst_16 = arith.constant dense<0.000000e+00> : vector<32x8xf32>
    %32 = tpu.matmul %29, %30, %cst_16 {dimension_numbers = #tpu.dot_dimension_numbers<[1], [0], [0], [1], [0, 0, 1, 1], [], []>} : vector<32x32xf32>, vector<32x8xf32>, vector<32x8xf32> -> vector<32x8xf32>
    %33 = vector.broadcast %31 : vector<1x8xf32> to vector<32x8xf32>
    %34 = arith.addf %32, %33 : vector<32x8xf32>
    %cst_17 = arith.constant dense<0xFF800000> : vector<32xf32>
    %35 = vector.multi_reduction <maximumf>, %34, %cst_17 [1] : vector<32x8xf32> to vector<32xf32>
    %36 = vector.shape_cast %35 : vector<32xf32> to vector<32x1xf32>
    %37 = vector.broadcast %36 : vector<32x1xf32> to vector<32x8xf32>
    %38 = arith.subf %34, %37 : vector<32x8xf32>
    %39 = math.exp %38 : vector<32x8xf32>
    %cst_18 = arith.constant dense<0.000000e+00> : vector<32xf32>
    %40 = vector.multi_reduction <add>, %39, %cst_18 [1] : vector<32x8xf32> to vector<32xf32>
    %41 = vector.shape_cast %40 : vector<32xf32> to vector<32x1xf32>
    %42 = tpu.reciprocal %41 : vector<32x1xf32> -> vector<32x1xf32>
    %43 = vector.broadcast %42 : vector<32x1xf32> to vector<32x8xf32>
    %44 = arith.mulf %39, %43 : vector<32x8xf32>
    %c0_19 = arith.constant 0 : index
    %c0_20 = arith.constant 0 : index
    %45 = vector.load %arg9[%c0_19, %c0_20] : memref<32x8xf32, #tpu.memory_space<vmem>>, vector<32x8xf32>
    tpu.vector_store %arg9[%c0_19, %c0_20], %44 {strides = array<i32>} : memref<32x8xf32, #tpu.memory_space<vmem>>, vector<32x8xf32>,
    return
  }
  func.func @transform_0(%arg0: i32) -> (i32, i32) {
    %c0_i32 = arith.constant 0 : i32
    %c0_i32_0 = arith.constant 0 : i32
    return %arg0, %c0_i32 : i32, i32
  }
  func.func @transform_1(%arg0: i32) -> (i32, i32) {
    %c0_i32 = arith.constant 0 : i32
    %c0_i32_0 = arith.constant 0 : i32
    return %arg0, %c0_i32 : i32, i32
  }
  func.func @transform_2(%arg0: i32) -> (i32, i32) {
    %c0_i32 = arith.constant 0 : i32
    %c0_i32_0 = arith.constant 0 : i32
    %c0_i32_1 = arith.constant 0 : i32
    return %c0_i32, %c0_i32_0 : i32, i32
  }
  func.func @transform_3(%arg0: i32) -> (i32, i32) {
    %c0_i32 = arith.constant 0 : i32
    %c0_i32_0 = arith.constant 0 : i32
    %c0_i32_1 = arith.constant 0 : i32
    return %c0_i32, %c0_i32_0 : i32, i32
  }
  func.func @transform_4(%arg0: i32) -> (i32, i32) {
    %c0_i32 = arith.constant 0 : i32
    %c0_i32_0 = arith.constant 0 : i32
    %c0_i32_1 = arith.constant 0 : i32
    return %c0_i32, %c0_i32_0 : i32, i32
  }
  func.func @transform_5(%arg0: i32) -> (i32, i32) {
    %c0_i32 = arith.constant 0 : i32
    %c0_i32_0 = arith.constant 0 : i32
    %c0_i32_1 = arith.constant 0 : i32
    return %c0_i32, %c0_i32_0 : i32, i32
  }
  func.func @transform_6(%arg0: i32) -> (i32, i32) {
    %c0_i32 = arith.constant 0 : i32
    %c0_i32_0 = arith.constant 0 : i32
    %c0_i32_1 = arith.constant 0 : i32
    return %c0_i32, %c0_i32_0 : i32, i32
  }
  func.func @transform_7(%arg0: i32) -> (i32, i32) {
    %c0_i32 = arith.constant 0 : i32
    %c0_i32_0 = arith.constant 0 : i32
    %c0_i32_1 = arith.constant 0 : i32
    return %c0_i32, %c0_i32_0 : i32, i32
  }
  func.func @transform_8(%arg0: i32) -> (i32, i32) {
    %c0_i32 = arith.constant 0 : i32
    %c0_i32_0 = arith.constant 0 : i32
    return %arg0, %c0_i32 : i32, i32
  }
}

</mosaic_0001>

<llo_original>
// kernel: tpu_custom_call.1
$region0: #{tpu_custom_call.1}
  #allocation0 [shape = 'u32[]', space=smem, size = 0x4, offset = 0x4, fixed_abs, tag = 'smem constant byte address 0x4 - core index']
  #allocation1 [shape = 'u32[72,128]{1,0:T(1,128)}', space=vmem, size = 0x9000, scoped, tag = 'internal scratch']
  %s0 = inlined_call_operand.vmem [shape: f32[64,16], index: 0, kind: input, shape index: {}]
  %s1 = inlined_call_operand.vmem [shape: f32[64,1], index: 1, kind: input, shape index: {}]
  %s2 = inlined_call_operand.vmem [shape: f32[16,32], index: 2, kind: input, shape index: {}]
  %s3 = inlined_call_operand.vmem [shape: f32[3,32], index: 3, kind: input, shape index: {}]
  %s4 = inlined_call_operand.vmem [shape: f32[32,32], index: 4, kind: input, shape index: {}]
  %s5 = inlined_call_operand.vmem [shape: f32[3,32], index: 5, kind: input, shape index: {}]
  %s6 = inlined_call_operand.vmem [shape: f32[32,8], index: 6, kind: input, shape index: {}]
  %s7 = inlined_call_operand.vmem [shape: f32[1,8], index: 7, kind: input, shape index: {}]
  %s8 = inlined_call_operand.vmem [shape: f32[64,8], index: 8, kind: output, shape index: {}]
  %s9 = sld [smem:[#allocation0]]
  $region65: #{tpu_custom_call.1} parent=0
    _
  %s11 = ssub.s32 1, %s9
  %s12 = scalar_select 0, %s11, %s9
  loop: start=0, step=1, limit=4
  $region2: #{tpu_custom_call.1} parent=0 // loop_pre_header
    _
  $region3: #{tpu_custom_call.1} parent=0 // loop_header
    %s14 = sphi 0, %s18
    %p15 = scmp.ge.s32.totalorder %s14, 4
    %s24 = sphi 0, %s26
    %s27 = sphi 0, %s24
    %s28 = sphi 0, %s27
    %s44 = sphi 0, %s28
    %s50 = sphi 0, %s52
    %s53 = sphi 0, %s50
    %s54 = sphi 0, %s53
    %s70 = sphi 0, %s54
    %s74 = sphi 0, %s74
    %s76 = sphi 0, %s74
    %s77 = sphi 0, %s76
    %s91 = sphi 0, %s77
    %s95 = sphi 0, %s95
    %s97 = sphi 0, %s95
    %s98 = sphi 0, %s97
    %s112 = sphi 0, %s98
    %s116 = sphi 0, %s116
    %s118 = sphi 0, %s116
    %s119 = sphi 0, %s118
    %s133 = sphi 0, %s119
    %s137 = sphi 0, %s137
    %s139 = sphi 0, %s137
    %s140 = sphi 0, %s139
    %s154 = sphi 0, %s140
    %s158 = sphi 0, %s158
    %s160 = sphi 0, %s158
    %s161 = sphi 0, %s160
    %s175 = sphi 0, %s161
    %s179 = sphi 0, %s179
    %s181 = sphi 0, %s179
    %s182 = sphi 0, %s181
    %s196 = sphi 0, %s182
    %s202 = sphi 0, %s204
    %s205 = sphi 0, %s202
    %s206 = sphi 0, %s205
    %s222 = sphi 0, %s206
  $region4: #{tpu_custom_call.1} parent=0 // loop_header_branch
    %17 = sbr.rel (%p15) target = $region8
  $region5: #{tpu_custom_call.1} parent=0 // loop_body
    %s19 = ssub.s32 %s14, 1
    %s20 = ssub.s32 %s14, 2
    %s21 = sadd.s32 %s14, 1
    %s22 = ssub.s32 %s14, %s21
    %p23 = scmp.eq.s32.totalorder %s22, 0
    %s25 = sadd.s32 %s24, 1
    %s26 = scalar_select %p23, %s24, %s25
    %p29 = pneg %p23
    %p30 = scmp.eq.s32.totalorder %s14, 1
    %p31 = por %p29, %p30
    %p32 = scmp.ne.s32.totalorder %s24, %s27
    %p33 = scmp.eq.s32.totalorder %s14, 0
    %p34 = por %p32, %p33
    %p35 = scmp.ne.s32.totalorder %s24, %s27
    %p36 = scmp.eq.s32.totalorder %s19, 1
    %p37 = por %p35, %p36
    %p38 = scmp.ne.s32.totalorder %s27, %s28
    %p39 = scmp.eq.s32.totalorder %s19, 0
    %p40 = por %p38, %p39
    %p41 = scmp.ne.s32.totalorder %s27, %s28
    %p42 = scmp.eq.s32.totalorder %s20, 1
    %p43 = por %p41, %p42
    %p45 = scmp.ne.s32.totalorder %s28, %s44
    %p46 = scmp.eq.s32.totalorder %s20, 0
    %p47 = por %p45, %p46
    %s48 = ssub.s32 %s14, %s21
    %p49 = scmp.eq.s32.totalorder %s48, 0
    %s51 = sadd.s32 %s50, 1
    %s52 = scalar_select %p49, %s50, %s51
    %p55 = pneg %p49
    %p56 = scmp.eq.s32.totalorder %s14, 1
    %p57 = por %p55, %p56
    %p58 = scmp.ne.s32.totalorder %s50, %s53
    %p59 = scmp.eq.s32.totalorder %s14, 0
    %p60 = por %p58, %p59
    %p61 = scmp.ne.s32.totalorder %s50, %s53
    %p62 = scmp.eq.s32.totalorder %s19, 1
    %p63 = por %p61, %p62
    %p64 = scmp.ne.s32.totalorder %s53, %s54
    %p65 = scmp.eq.s32.totalorder %s19, 0
    %p66 = por %p64, %p65
    %p67 = scmp.ne.s32.totalorder %s53, %s54
    %p68 = scmp.eq.s32.totalorder %s20, 1
    %p69 = por %p67, %p68
    %p71 = scmp.ne.s32.totalorder %s54, %s70
    %p72 = scmp.eq.s32.totalorder %s20, 0
    %p73 = por %p71, %p72
    %s75 = sadd.s32 %s74, 1
    %p78 = scmp.eq.s32.totalorder %s14, 1
    %p79 = scmp.ne.s32.totalorder %s74, %s76
    %p80 = scmp.eq.s32.totalorder %s14, 0
    %p81 = por %p79, %p80
    %p82 = scmp.ne.s32.totalorder %s74, %s76
    %p83 = scmp.eq.s32.totalorder %s19, 1
    %p84 = por %p82, %p83
    %p85 = scmp.ne.s32.totalorder %s76, %s77
    %p86 = scmp.eq.s32.totalorder %s19, 0
    %p87 = por %p85, %p86
    %p88 = scmp.ne.s32.totalorder %s76, %s77
    %p89 = scmp.eq.s32.totalorder %s20, 1
    %p90 = por %p88, %p89
    %p92 = scmp.ne.s32.totalorder %s77, %s91
    %p93 = scmp.eq.s32.totalorder %s20, 0
    %p94 = por %p92, %p93
    %s96 = sadd.s32 %s95, 1
    %p99 = scmp.eq.s32.totalorder %s14, 1
    %p100 = scmp.ne.s32.totalorder %s95, %s97
    %p101 = scmp.eq.s32.totalorder %s14, 0
    %p102 = por %p100, %p101
    %p103 = scmp.ne.s32.totalorder %s95, %s97
    %p104 = scmp.eq.s32.totalorder %s19, 1
    %p105 = por %p103, %p104
    %p106 = scmp.ne.s32.totalorder %s97, %s98
    %p107 = scmp.eq.s32.totalorder %s19, 0
    %p108 = por %p106, %p107
    %p109 = scmp.ne.s32.totalorder %s97, %s98
    %p110 = scmp.eq.s32.totalorder %s20, 1
    %p111 = por %p109, %p110
    %p113 = scmp.ne.s32.totalorder %s98, %s112
    %p114 = scmp.eq.s32.totalorder %s20, 0
    %p115 = por %p113, %p114
    %s117 = sadd.s32 %s116, 1
    %p120 = scmp.eq.s32.totalorder %s14, 1
    %p121 = scmp.ne.s32.totalorder %s116, %s118
    %p122 = scmp.eq.s32.totalorder %s14, 0
    %p123 = por %p121, %p122
    %p124 = scmp.ne.s32.totalorder %s116, %s118
    %p125 = scmp.eq.s32.totalorder %s19, 1
    %p126 = por %p124, %p125
    %p127 = scmp.ne.s32.totalorder %s118, %s119
    %p128 = scmp.eq.s32.totalorder %s19, 0
    %p129 = por %p127, %p128
    %p130 = scmp.ne.s32.totalorder %s118, %s119
    %p131 = scmp.eq.s32.totalorder %s20, 1
    %p132 = por %p130, %p131
    %p134 = scmp.ne.s32.totalorder %s119, %s133
    %p135 = scmp.eq.s32.totalorder %s20, 0
    %p136 = por %p134, %p135
    %s138 = sadd.s32 %s137, 1
    %p141 = scmp.eq.s32.totalorder %s14, 1
    %p142 = scmp.ne.s32.totalorder %s137, %s139
    %p143 = scmp.eq.s32.totalorder %s14, 0
    %p144 = por %p142, %p143
    %p145 = scmp.ne.s32.totalorder %s137, %s139
    %p146 = scmp.eq.s32.totalorder %s19, 1
    %p147 = por %p145, %p146
    %p148 = scmp.ne.s32.totalorder %s139, %s140
    %p149 = scmp.eq.s32.totalorder %s19, 0
    %p150 = por %p148, %p149
    %p151 = scmp.ne.s32.totalorder %s139, %s140
    %p152 = scmp.eq.s32.totalorder %s20, 1
    %p153 = por %p151, %p152
    %p155 = scmp.ne.s32.totalorder %s140, %s154
    %p156 = scmp.eq.s32.totalorder %s20, 0
    %p157 = por %p155, %p156
    %s159 = sadd.s32 %s158, 1
    %p162 = scmp.eq.s32.totalorder %s14, 1
    %p163 = scmp.ne.s32.totalorder %s158, %s160
    %p164 = scmp.eq.s32.totalorder %s14, 0
    %p165 = por %p163, %p164
    %p166 = scmp.ne.s32.totalorder %s158, %s160
    %p167 = scmp.eq.s32.totalorder %s19, 1
    %p168 = por %p166, %p167
    %p169 = scmp.ne.s32.totalorder %s160, %s161
    %p170 = scmp.eq.s32.totalorder %s19, 0
    %p171 = por %p169, %p170
    %p172 = scmp.ne.s32.totalorder %s160, %s161
    %p173 = scmp.eq.s32.totalorder %s20, 1
    %p174 = por %p172, %p173
    %p176 = scmp.ne.s32.totalorder %s161, %s175
    %p177 = scmp.eq.s32.totalorder %s20, 0
    %p178 = por %p176, %p177
    %s180 = sadd.s32 %s179, 1
    %p183 = scmp.eq.s32.totalorder %s14, 1
    %p184 = scmp.ne.s32.totalorder %s179, %s181
    %p185 = scmp.eq.s32.totalorder %s14, 0
    %p186 = por %p184, %p185
    %p187 = scmp.ne.s32.totalorder %s179, %s181
    %p188 = scmp.eq.s32.totalorder %s19, 1
    %p189 = por %p187, %p188
    %p190 = scmp.ne.s32.totalorder %s181, %s182
    %p191 = scmp.eq.s32.totalorder %s19, 0
    %p192 = por %p190, %p191
    %p193 = scmp.ne.s32.totalorder %s181, %s182
    %p194 = scmp.eq.s32.totalorder %s20, 1
    %p195 = por %p193, %p194
    %p197 = scmp.ne.s32.totalorder %s182, %s196
    %p198 = scmp.eq.s32.totalorder %s20, 0
    %p199 = por %p197, %p198
    %s200 = ssub.s32 %s14, %s21
    %p201 = scmp.eq.s32.totalorder %s200, 0
    %s203 = sadd.s32 %s202, 1
    %s204 = scalar_select %p201, %s202, %s203
    %p207 = pneg %p201
    %p208 = scmp.eq.s32.totalorder %s14, 1
    %p209 = por %p207, %p208
    %p210 = scmp.ne.s32.totalorder %s202, %s205
    %p211 = scmp.eq.s32.totalorder %s14, 0
    %p212 = por %p210, %p211
    %p213 = scmp.ne.s32.totalorder %s202, %s205
    %p214 = scmp.eq.s32.totalorder %s19, 1
    %p215 = por %p213, %p214
    %p216 = scmp.ne.s32.totalorder %s205, %s206
    %p217 = scmp.eq.s32.totalorder %s19, 0
    %p218 = por %p216, %p217
    %p219 = scmp.ne.s32.totalorder %s205, %s206
    %p220 = scmp.eq.s32.totalorder %s20, 1
    %p221 = por %p219, %p220
    %p223 = scmp.ne.s32.totalorder %s206, %s222
    %p224 = scmp.eq.s32.totalorder %s20, 0
    %p225 = por %p223, %p224
    %p226 = scmp.le.s32.totalorder 1, %s14
    %p227 = scmp.lt.s32.totalorder %s14, 3
    %p228 = pnand %p226, %p227
    %p229 = pneg %p228
    // Predicated region
    $region9: #{tpu_custom_call.1} parent=5 // pred_check
      _
    $region10: #{tpu_custom_call.1} parent=5 // pred_check_branch
      %231 = sbr.rel (%p228) target = $region12
    $region11: #{tpu_custom_call.1} parent=5 // pred_region
      %s232 = ssub.s32 %s14, 1
      // Predicated region
      $region13: #{tpu_custom_call.1} parent=11 // pred_check
        %p233 = pneg %p87
      $region14: #{tpu_custom_call.1} parent=11 // pred_check_branch
        %235 = sbr.rel (%p233) target = $region16
      $region15: #{tpu_custom_call.1} parent=11 // pred_region
        _
      $region16: #{tpu_custom_call.1} parent=11 // pred_fallthru
        _
      // Predicated region
      $region17: #{tpu_custom_call.1} parent=11 // pred_check
        %p236 = pneg %p108
      $region18: #{tpu_custom_call.1} parent=11 // pred_check_branch
        %238 = sbr.rel (%p236) target = $region20
      $region19: #{tpu_custom_call.1} parent=11 // pred_region
        _
      $region20: #{tpu_custom_call.1} parent=11 // pred_fallthru
        _
      // Predicated region
      $region21: #{tpu_custom_call.1} parent=11 // pred_check
        %p239 = pneg %p129
      $region22: #{tpu_custom_call.1} parent=11 // pred_check_branch
        %241 = sbr.rel (%p239) target = $region24
      $region23: #{tpu_custom_call.1} parent=11 // pred_region
        _
      $region24: #{tpu_custom_call.1} parent=11 // pred_fallthru
        _
      // Predicated region
      $region25: #{tpu_custom_call.1} parent=11 // pred_check
        %p242 = pneg %p150
      $region26: #{tpu_custom_call.1} parent=11 // pred_check_branch
        %244 = sbr.rel (%p242) target = $region28
      $region27: #{tpu_custom_call.1} parent=11 // pred_region
        _
      $region28: #{tpu_custom_call.1} parent=11 // pred_fallthru
        _
      // Predicated region
      $region29: #{tpu_custom_call.1} parent=11 // pred_check
        %p245 = pneg %p171
      $region30: #{tpu_custom_call.1} parent=11 // pred_check_branch
        %247 = sbr.rel (%p245) target = $region32
      $region31: #{tpu_custom_call.1} parent=11 // pred_region
        _
      $region32: #{tpu_custom_call.1} parent=11 // pred_fallthru
        _
      // Predicated region
      $region33: #{tpu_custom_call.1} parent=11 // pred_check
        %p248 = pneg %p192
      $region34: #{tpu_custom_call.1} parent=11 // pred_check_branch
        %250 = sbr.rel (%p248) target = $region36
      $region35: #{tpu_custom_call.1} parent=11 // pred_region
        _
      $region36: #{tpu_custom_call.1} parent=11 // pred_fallthru
        _
    $region12: #{tpu_custom_call.1} parent=5 // pred_fallthru
      _
    %p251 = scmp.lt.s32.totalorder %s14, 2
    // Predicated region
    $region37: #{tpu_custom_call.1} parent=5 // pred_check
      %p252 = pneg %p251
    $region38: #{tpu_custom_call.1} parent=5 // pred_check_branch
      %254 = sbr.rel (%p252) target = $region40
    $region39: #{tpu_custom_call.1} parent=5 // pred_region
      // Predicated region
      $region41: #{tpu_custom_call.1} parent=39 // pred_check
        %p255 = pneg %p34
      $region42: #{tpu_custom_call.1} parent=39 // pred_check_branch
        %257 = sbr.rel (%p255) target = $region44
      $region43: #{tpu_custom_call.1} parent=39 // pred_region
        %s258 = smul.u32 4, %s14
        %p259 = scmp.lt.s32.totalorder %s258, 7
        %s260 = scalar_select %p259, %s258, 7
        %s261 = smul.addr %s260, 8
        %s262 = scalar_lea.vmem %s0, %s261
        %s263 = smul.u32 4, %s14
      $region44: #{tpu_custom_call.1} parent=39 // pred_fallthru
        _
      // Predicated region
      $region45: #{tpu_custom_call.1} parent=39 // pred_check
        %p264 = pneg %p60
      $region46: #{tpu_custom_call.1} parent=39 // pred_check_branch
        %266 = sbr.rel (%p264) target = $region48
      $region47: #{tpu_custom_call.1} parent=39 // pred_region
        %s267 = smul.u32 4, %s14
        %p268 = scmp.lt.s32.totalorder %s267, 7
        %s269 = scalar_select %p268, %s267, 7
        %s270 = smul.addr %s269, 8
        %s271 = scalar_lea.vmem %s1, %s270
        %s272 = smul.u32 4, %s14
      $region48: #{tpu_custom_call.1} parent=39 // pred_fallthru
        _
    $region40: #{tpu_custom_call.1} parent=5 // pred_fallthru
      _
    %p273 = scmp.le.s32.totalorder 1, %s14
    %p274 = scmp.lt.s32.totalorder %s14, 3
    %p275 = pnand %p273, %p274
    %p276 = pneg %p275
    // Predicated region
    $region49: #{tpu_custom_call.1} parent=5 // pred_check
      _
    $region50: #{tpu_custom_call.1} parent=5 // pred_check_branch
      %278 = sbr.rel (%p275) target = $region52
    $region51: #{tpu_custom_call.1} parent=5 // pred_region
      %s279 = ssub.s32 %s14, 1
      %s280 = smul.u32 4, %s19
      %p281 = scmp.lt.s32.totalorder %s280, 7
      %s282 = scalar_select %p281, %s280, 7
      %s283 = smul.addr %s282, 8
      %s284 = scalar_lea.vmem %s0, %s283
      %p285 = pneg %p40
      %p286 = pneg %p37
      %s287 = smul.u32 4, %s19
      %p288 = scmp.lt.s32.totalorder %s287, 7
      %s289 = scalar_select %p288, %s287, 7
      %s290 = smul.addr %s289, 8
      %s291 = scalar_lea.vmem %s1, %s290
      %p292 = pneg %p66
      %p293 = pneg %p63
      %p294 = pneg %p87
      %p295 = pneg %p84
      %p296 = pneg %p108
      %p297 = pneg %p105
      %p298 = pneg %p129
      %p299 = pneg %p126
      %p300 = pneg %p150
      %p301 = pneg %p147
      %p302 = pneg %p171
      %p303 = pneg %p168
      %p304 = pneg %p192
      %p305 = pneg %p189
      %p306 = pneg %p218
      %p307 = pneg %p215
      %s308 = smul.u32 4, %s19
      %p309 = scmp.lt.s32.totalorder %s308, 7
      %s310 = scalar_select %p309, %s308, 7
      %s311 = smul.addr %s310, 8
      %s312 = scalar_lea.vmem %s8, %s311
      %s313 = smul.u32 4, %s19
      %p314 = scmp.lt.s32.totalorder %s313, 7
      %s315 = scalar_select %p314, %s313, 7
      %s316 = smul.addr %s315, 8
      %s317 = scalar_lea.vmem %s0, %s316
      %s318 = smul.u32 4, %s19
      %s319 = smul.u32 4, %s19
      %p320 = scmp.lt.s32.totalorder %s319, 7
      %s321 = scalar_select %p320, %s319, 7
      %s322 = smul.addr %s321, 8
      %s323 = scalar_lea.vmem %s1, %s322
      %s324 = smul.u32 4, %s19
      %s325 = smul.u32 4, %s19
      %p326 = scmp.lt.s32.totalorder %s325, 7
      %s327 = scalar_select %p326, %s325, 7
      %s328 = smul.addr %s327, 8
      %s329 = scalar_lea.vmem %s8, %s328
      %s330 = smul.u32 4, %s19
      %v331 = vld [vmem:[%s317] sm:$0xff]
      %v332 = vld [vmem:[%s317 + $0x8] sm:$0xff]
      %v333 = vld [vmem:[%s317 + $0x10] sm:$0xff]
      %v334 = vld [vmem:[%s317 + $0x18] sm:$0xff]
      %v335 = vld [vmem:[%s323] sm:$0xff]
      %v336 = vld [vmem:[%s323 + $0x8] sm:$0xff]
      %v337 = vld [vmem:[%s323 + $0x10] sm:$0xff]
      %v338 = vld [vmem:[%s323 + $0x18] sm:$0xff]
      %v339 = vld [vmem:[%s2] sm:$0xff]
      %v340 = vld [vmem:[%s2 + $0x8] sm:$0xff]
      %v341 = vld [vmem:[%s3] sm:$0x7]
      %v342 = vperm.slane %v341, 0
      %vm343 = vcmask 130048
      %v345 = vsel %vm343, %v331, 0
      %v348 = vsel %vm343, %v332, 0
      %v351 = vsel %vm343, %v333, 0
      %v354 = vsel %vm343, %v334, 0
      %356 = vmatpush.msra.mxu0 0.0
      %357 = vmatpush.msra.mxu0 0.0
      %358 = vmatpush.msra.mxu0 0.0
      %359 = vmatpush.msra.mxu0 0.0
      %360 = vmatpush.msra.mxu0 0.0
      %361 = vmatpush.msra.mxu0 0.0
      %362 = vmatpush.msra.mxu0 0.0
      %363 = vmatpush.msra.mxu0 0.0
      %364 = vmatpush.msra.mxu0 0.0
      %365 = vmatpush.msra.mxu0 0.0
      %366 = vmatpush.msra.mxu0 0.0
      %367 = vmatpush.msra.mxu0 0.0
      %368 = vmatpush.msra.mxu0 0.0
      %369 = vmatpush.msra.mxu0 0.0
      %370 = vmatpush.msra.mxu0 %v340
      %371 = vmatpush.msra.mxu0 %v339
      %372 = vmatmul.f32.gmra.mxu0 %v345
      %v373 = vpop.f32.mrf.mxu0
      %v374 = vadd.f32 %v342, %v373
      %375 = vmatmul.f32.gmra.mxu0 %v348
      %v376 = vpop.f32.mrf.mxu0
      %v377 = vadd.f32 %v342, %v376
      %378 = vmatmul.f32.gmra.mxu0 %v351
      %v379 = vpop.f32.mrf.mxu0
      %v380 = vadd.f32 %v342, %v379
      %381 = vmatmul.f32.gmra.mxu0 %v354
      %v382 = vpop.f32.mrf.mxu0
      %v383 = vadd.f32 %v342, %v382
      %384 = vdwg.mxu0
      %386 = vset.pattern.permute.xlu0 0
      %387 = vperm.xlu0 %386, %v335
      %v388 = vpop.permute.xlu0 %387
      %391 = vset.pattern.permute.xlu0 0
      %392 = vperm.xlu0 %391, %v336
      %v393 = vpop.permute.xlu0 %392
      %396 = vset.pattern.permute.xlu0 0
      %397 = vperm.xlu0 %396, %v337
      %v398 = vpop.permute.xlu0 %397
      %401 = vset.pattern.permute.xlu0 0
      %402 = vperm.xlu0 %401, %v338
      %v403 = vpop.permute.xlu0 %402
      %v405 = vperm.slane %v341, 1
      %v406 = vmul.f32 %v388, %v405
      %v407 = vmul.f32 %v393, %v405
      %v408 = vmul.f32 %v398, %v405
      %v409 = vmul.f32 %v403, %v405
      %v410 = vperm.slane %v341, 2
      %v411 = vadd.f32 %v406, %v410
      %v412 = vadd.f32 %v407, %v410
      %v413 = vadd.f32 %v408, %v410
      %v414 = vadd.f32 %v409, %v410
      %v415 = vmax.f32 %v374, %v411
      %v416 = vmax.f32 %v377, %v412
      %v417 = vmax.f32 %v380, %v413
      %v418 = vmax.f32 %v383, %v414
      %v419 = vld [vmem:[%s4] sm:$0xff]
      %v420 = vld [vmem:[%s4 + $0x8] sm:$0xff]
      %v421 = vld [vmem:[%s4 + $0x10] sm:$0xff]
      %v422 = vld [vmem:[%s4 + $0x18] sm:$0xff]
      %v423 = vld [vmem:[%s5] sm:$0x7]
      %v424 = vperm.slane %v423, 0
      %vm425 = vcmask 261120
      %v427 = vsel %vm425, %v415, 0
      %v430 = vsel %vm425, %v416, 0
      %v433 = vsel %vm425, %v417, 0
      %v436 = vsel %vm425, %v418, 0
      %438 = vmatpush.msra.mxu0 0.0
      %439 = vmatpush.msra.mxu0 0.0
      %440 = vmatpush.msra.mxu0 0.0
      %441 = vmatpush.msra.mxu0 0.0
      %442 = vmatpush.msra.mxu0 0.0
      %443 = vmatpush.msra.mxu0 0.0
      %444 = vmatpush.msra.mxu0 0.0
      %445 = vmatpush.msra.mxu0 0.0
      %446 = vmatpush.msra.mxu0 0.0
      %447 = vmatpush.msra.mxu0 0.0
      %448 = vmatpush.msra.mxu0 0.0
      %449 = vmatpush.msra.mxu0 0.0
      %450 = vmatpush.msra.mxu0 %v422
      %451 = vmatpush.msra.mxu0 %v421
      %452 = vmatpush.msra.mxu0 %v420
      %453 = vmatpush.msra.mxu0 %v419
      %454 = vmatmul.f32.gmra.mxu0 %v427
      %v455 = vpop.f32.mrf.mxu0
      %v456 = vadd.f32 %v424, %v455
      %457 = vmatmul.f32.gmra.mxu0 %v430
      %v458 = vpop.f32.mrf.mxu0
      %v459 = vadd.f32 %v424, %v458
      %460 = vmatmul.f32.gmra.mxu0 %v433
      %v461 = vpop.f32.mrf.mxu0
      %v462 = vadd.f32 %v424, %v461
      %463 = vmatmul.f32.gmra.mxu0 %v436
      %v464 = vpop.f32.mrf.mxu0
      %v465 = vadd.f32 %v424, %v464
      %466 = vdwg.mxu0
      %v467 = vperm.slane %v423, 1
      %v468 = vmul.f32 %v388, %v467
      %v469 = vmul.f32 %v393, %v467
      %v470 = vmul.f32 %v398, %v467
      %v471 = vmul.f32 %v403, %v467
      %v472 = vperm.slane %v423, 2
      %v473 = vadd.f32 %v468, %v472
      %v474 = vadd.f32 %v469, %v472
      %v475 = vadd.f32 %v470, %v472
      %v476 = vadd.f32 %v471, %v472
      %v477 = vmax.f32 %v456, %v473
      %v478 = vmax.f32 %v459, %v474
      %v479 = vmax.f32 %v462, %v475
      %v480 = vmax.f32 %v465, %v476
      %v481 = vld [vmem:[%s6] sm:$0xff]
      %v482 = vld [vmem:[%s6 + $0x8] sm:$0xff]
      %v483 = vld [vmem:[%s6 + $0x10] sm:$0xff]
      %v484 = vld [vmem:[%s6 + $0x18] sm:$0xff]
      %v485 = vld [vmem:[%s7] sm:$0x1]
      %v487 = vperm.slane %v485, 0
      %v490 = vsel %vm425, %v477, 0
      %v493 = vsel %vm425, %v478, 0
      %v496 = vsel %vm425, %v479, 0
      %v499 = vsel %vm425, %v480, 0
      %501 = vmatpush.msra.mxu0 0.0
      %502 = vmatpush.msra.mxu0 0.0
      %503 = vmatpush.msra.mxu0 0.0
      %504 = vmatpush.msra.mxu0 0.0
      %505 = vmatpush.msra.mxu0 0.0
      %506 = vmatpush.msra.mxu0 0.0
      %507 = vmatpush.msra.mxu0 0.0
      %508 = vmatpush.msra.mxu0 0.0
      %509 = vmatpush.msra.mxu0 0.0
      %510 = vmatpush.msra.mxu0 0.0
      %511 = vmatpush.msra.mxu0 0.0
      %512 = vmatpush.msra.mxu0 0.0
      %513 = vmatpush.msra.mxu0 %v484
      %514 = vmatpush.msra.mxu0 %v483
      %515 = vmatpush.msra.mxu0 %v482
      %516 = vmatpush.msra.mxu0 %v481
      %517 = vmatmul.f32.gmra.mxu0 %v490
      %v518 = vpop.f32.mrf.mxu0
      %v519 = vadd.f32 %v487, %v518
      %520 = vmatmul.f32.gmra.mxu0 %v493
      %v521 = vpop.f32.mrf.mxu0
      %v522 = vadd.f32 %v487, %v521
      %523 = vmatmul.f32.gmra.mxu0 %v496
      %v524 = vpop.f32.mrf.mxu0
      %v525 = vadd.f32 %v487, %v524
      %526 = vmatmul.f32.gmra.mxu0 %v499
      %v527 = vpop.f32.mrf.mxu0
      %v528 = vadd.f32 %v487, %v527
      %529 = vdwg.mxu0
      %vm530 = vcmask 64512
      %v531 = vsel %vm530, %v519, -inf
      %532 = vmax.xlane.f32.xlu0 %v531
      %v533 = vpop.xlane.xlu0 %532
      %v534 = vsel %vm530, %v522, -inf
      %535 = vmax.xlane.f32.xlu0 %v534
      %v536 = vpop.xlane.xlu0 %535
      %v537 = vsel %vm530, %v525, -inf
      %538 = vmax.xlane.f32.xlu0 %v537
      %v539 = vpop.xlane.xlu0 %538
      %v540 = vsel %vm530, %v528, -inf
      %541 = vmax.xlane.f32.xlu0 %v540
      %v542 = vpop.xlane.xlu0 %541
      %v543 = vsub.f32 %v519, %v533
      %v544 = vsub.f32 %v522, %v536
      %v545 = vsub.f32 %v525, %v539
      %v546 = vsub.f32 %v528, %v542
      %v547 = vmul.f32 %v543, 1.442695
      %v548 = vpow.pop %v547
      %v549 = vmul.f32 %v544, 1.442695
      %v550 = vpow.pop %v549
      %v551 = vmul.f32 %v545, 1.442695
      %v552 = vpow.pop %v551
      %v553 = vmul.f32 %v546, 1.442695
      %v554 = vpow.pop %v553
      %v555 = vsel %vm530, %v548, 0.0
      %556 = vadd.xlane.f32.xlu0 %v555
      %v557 = vpop.xlane.xlu0 %556
      %v558 = vsel %vm530, %v550, 0.0
      %559 = vadd.xlane.f32.xlu0 %v558
      %v560 = vpop.xlane.xlu0 %559
      %v561 = vsel %vm530, %v552, 0.0
      %562 = vadd.xlane.f32.xlu0 %v561
      %v563 = vpop.xlane.xlu0 %562
      %v564 = vsel %vm530, %v554, 0.0
      %565 = vadd.xlane.f32.xlu0 %v564
      %v566 = vpop.xlane.xlu0 %565
      %v567 = vrcp.pop %v557
      %v568 = vmul.f32 %v557, %v567
      %v569 = vsub.f32 1.0, %v568
      %v570 = vmul.f32 %v567, %v569
      %v571 = vadd.f32 %v567, %v570
      %vm572 = vweird.f32 %v557
      %vm573 = vweird.f32 %v567
      %vm574 = vmor %vm572, %vm573
      %v575 = vsel %vm574, %v567, %v571
      %v576 = vand.u32 2147483647, %v557
      %vm577 = vcmp.eq.f32.partialorder %v576, 8.507059e+37
      %v578 = vand.u32 %v557, 2147483648
      %v579 = vor.u32 1.1754944e-38, %v578
      %v580 = vsel %vm577, %v579, %v575
      %v581 = vrcp.pop %v560
      %v582 = vmul.f32 %v560, %v581
      %v583 = vsub.f32 1.0, %v582
      %v584 = vmul.f32 %v581, %v583
      %v585 = vadd.f32 %v581, %v584
      %vm586 = vweird.f32 %v560
      %vm587 = vweird.f32 %v581
      %vm588 = vmor %vm586, %vm587
      %v589 = vsel %vm588, %v581, %v585
      %v590 = vand.u32 2147483647, %v560
      %vm591 = vcmp.eq.f32.partialorder %v590, 8.507059e+37
      %v592 = vand.u32 %v560, 2147483648
      %v593 = vor.u32 1.1754944e-38, %v592
      %v594 = vsel %vm591, %v593, %v589
      %v595 = vrcp.pop %v563
      %v596 = vmul.f32 %v563, %v595
      %v597 = vsub.f32 1.0, %v596
      %v598 = vmul.f32 %v595, %v597
      %v599 = vadd.f32 %v595, %v598
      %vm600 = vweird.f32 %v563
      %vm601 = vweird.f32 %v595
      %vm602 = vmor %vm600, %vm601
      %v603 = vsel %vm602, %v595, %v599
      %v604 = vand.u32 2147483647, %v563
      %vm605 = vcmp.eq.f32.partialorder %v604, 8.507059e+37
      %v606 = vand.u32 %v563, 2147483648
      %v607 = vor.u32 1.1754944e-38, %v606
      %v608 = vsel %vm605, %v607, %v603
      %v609 = vrcp.pop %v566
      %v610 = vmul.f32 %v566, %v609
      %v611 = vsub.f32 1.0, %v610
      %v612 = vmul.f32 %v609, %v611
      %v613 = vadd.f32 %v609, %v612
      %vm614 = vweird.f32 %v566
      %vm615 = vweird.f32 %v609
      %vm616 = vmor %vm614, %vm615
      %v617 = vsel %vm616, %v609, %v613
      %v618 = vand.u32 2147483647, %v566
      %vm619 = vcmp.eq.f32.partialorder %v618, 8.507059e+37
      %v620 = vand.u32 %v566, 2147483648
      %v621 = vor.u32 1.1754944e-38, %v620
      %v622 = vsel %vm619, %v621, %v617
      %v623 = vmul.f32 %v548, %v580
      %v624 = vmul.f32 %v550, %v594
      %v625 = vmul.f32 %v552, %v608
      %v626 = vmul.f32 %v554, %v622
      %627 = vst.msk [vmem:[%s329] sm:$0xff] %vm530, %v623
      %628 = vst.msk [vmem:[%s329 + $0x8] sm:$0xff] %vm530, %v624
      %629 = vst.msk [vmem:[%s329 + $0x10] sm:$0xff] %vm530, %v625
      %630 = vst.msk [vmem:[%s329 + $0x18] sm:$0xff] %vm530, %v626
      %s631 = smul.u32 4, %s19
      %p632 = scmp.lt.s32.totalorder %s631, 7
      %s633 = scalar_select %p632, %s631, 7
      %s634 = smul.addr %s633, 8
      %s635 = scalar_lea.vmem %s8, %s634
      // Predicated region
      $region53: #{tpu_custom_call.1} parent=51 // pred_check
        %p636 = pneg %p215
      $region54: #{tpu_custom_call.1} parent=51 // pred_check_branch
        %638 = sbr.rel (%p636) target = $region56
      $region55: #{tpu_custom_call.1} parent=51 // pred_region
        %s639 = smul.u32 4, %s19
      $region56: #{tpu_custom_call.1} parent=51 // pred_fallthru
        _
    $region52: #{tpu_custom_call.1} parent=5 // pred_fallthru
      _
    %p640 = scmp.le.s32.totalorder 2, %s14
    // Predicated region
    $region57: #{tpu_custom_call.1} parent=5 // pred_check
      %p641 = pneg %p640
    $region58: #{tpu_custom_call.1} parent=5 // pred_check_branch
      %643 = sbr.rel (%p641) target = $region60
    $region59: #{tpu_custom_call.1} parent=5 // pred_region
      %s644 = ssub.s32 %s14, 2
      // Predicated region
      $region61: #{tpu_custom_call.1} parent=59 // pred_check
        %p645 = pneg %p221
      $region62: #{tpu_custom_call.1} parent=59 // pred_check_branch
        %647 = sbr.rel (%p645) target = $region64
      $region63: #{tpu_custom_call.1} parent=59 // pred_region
        %s648 = smul.u32 4, %s20
        %p649 = scmp.lt.s32.totalorder %s648, 7
        %s650 = scalar_select %p649, %s648, 7
        %s651 = smul.addr %s650, 8
        %s652 = scalar_lea.vmem %s8, %s651
      $region64: #{tpu_custom_call.1} parent=59 // pred_fallthru
        _
    $region60: #{tpu_custom_call.1} parent=5 // pred_fallthru
      _
  $region6: #{tpu_custom_call.1} parent=0 // loop_footer
    %s18 = sadd.s32 1, %s14
  $region7: #{tpu_custom_call.1} parent=0 // loop_footer_branch
    %13 = sbr.rel target = $region3
  $region8: #{tpu_custom_call.1} parent=0 // loop_exit
    _

</llo_original>
